<compile_context>
chip_gen: v6e
topology: v6e:2x2x1
jax: 0.10.0
libtpu: 0.0.40
codegen_flags: <defaults>
</compile_context>

<pallas_src>
import functools

import jax
import jax.numpy as jnp
from jax.experimental import pallas as pl
from jax.experimental.pallas import tpu as pltpu


def _channel_attention_kernel(x_ref, w1_ref, w2_ref, o_ref,
                              sum_acc, max_acc, *, hw_total):
    # x_ref   : (Nb, C, THW)  spatial tile of a batch block (native dtype)
    # w1_ref  : (C//r, C)     fc1 weight (1x1 conv == matmul over channels)
    # w2_ref  : (C, C//r)     fc2 weight
    # o_ref   : (Nb, C)       sigmoid channel attention (lane-dense)
    # sum_acc : (Nb, C) f32   running spatial sum
    # max_acc : (Nb, C) f32   running spatial max
    k = pl.program_id(1)
    n_k = pl.num_programs(1)
    nb, _, thw = x_ref.shape

    @pl.when(k == 0)
    def _init():
        sum_acc[...] = jnp.zeros_like(sum_acc)
        max_acc[...] = jnp.full_like(max_acc, -jnp.inf)

    x = x_ref[...]  # keep native dtype; widened only for the f32 accumulate

    if hw_total % thw != 0:
        # Ragged last spatial tile: neutralize padded lanes (sum->0, max->-inf).
        pos = k * thw + jax.lax.broadcasted_iota(jnp.int32, (1, 1, thw), 2)
        valid = pos < hw_total
        x_sum = jnp.where(valid, x, 0)
        x_max = jnp.where(valid, x, -jnp.inf)
    else:
        x_sum = x
        x_max = x

    # Reduce the whole tile to (Nb, C) partials each step.  Lane-chunk adds
    # run on the VPU; the single cross-lane pass per row runs on the XLU.
    # Both hide under the HBM DMA of the next tile (memory-bound kernel).
    sum_acc[...] += jnp.sum(x_sum.astype(jnp.float32), axis=-1)
    max_acc[...] = jnp.maximum(max_acc[...],
                               jnp.max(x_max, axis=-1).astype(jnp.float32))

    @pl.when(k == n_k - 1)
    def _finalize():
        avg = sum_acc[...] * (1.0 / hw_total)                     # (Nb, C)
        mx = max_acc[...]                                         # (Nb, C)

        # Fuse avg|max and the whole batch block into one MLP pass.
        pooled = jnp.concatenate([avg, mx], axis=0)               # (2*Nb, C)
        w1 = w1_ref[...]                                          # (C//r, C)
        w2 = w2_ref[...]                                          # (C, C//r)

        # pooled @ w1.T  -> (2*Nb, C//r)
        h = jax.lax.dot_general(pooled, w1, (((1,), (1,)), ((), ())),
                                preferred_element_type=jnp.float32)
        h = jnp.maximum(h, 0.0)
        # h @ w2.T -> (2*Nb, C)
        y = jax.lax.dot_general(h, w2, (((1,), (1,)), ((), ())),
                                preferred_element_type=jnp.float32)

        out = jax.nn.sigmoid(y[:nb] + y[nb:])                     # (Nb, C)
        o_ref[...] = out.astype(o_ref.dtype)


def _pick_block_hw(hw, block_n, c, itemsize, budget_bytes=10 * 1024 * 1024):
    """Largest spatial tile such that the double-buffered input window stays
    comfortably inside scoped-VMEM defaults on every generation (incl. v7x).
    Accumulators are only (block_n, C) f32 now, so nearly the whole budget
    goes to the input tile."""
    bytes_per_spatial = max(1, block_n * c * itemsize)
    max_thw = budget_bytes // bytes_per_spatial
    if hw <= max_thw:
        return hw                       # whole spatial extent in one step
    return max(128, (max_thw // 128) * 128)


def channel_attention(x, w1, w2, *, block_n=None, block_hw=None):
    """x: (N, C, H, W). w1: (C//r, C). w2: (C, C//r).
    Returns sigmoid channel attention of shape (N, C, 1, 1)."""
    N, C, H, W = x.shape
    hidden = w1.shape[0]
    HW = H * W
    x_flat = x.reshape(N, C, HW)

    # Hoist weight casts out of the kernel (done once, not per grid step).
    w1 = w1.astype(jnp.float32)
    w2 = w2.astype(jnp.float32)

    if block_n is None:
        # Output block sublane dim: multiple of 8 or the full batch dim
        # (satisfies the (8, 128) block constraint).
        block_n = 8 if (N % 8 == 0 and N > 8) else N
    assert N % block_n == 0, "block_n must divide N"

    if block_hw is None:
        block_hw = _pick_block_hw(HW, block_n, C, x.dtype.itemsize)
    assert block_hw == HW or block_hw % 128 == 0, \
        "block_hw must equal H*W or be a multiple of 128"

    grid = (N // block_n, pl.cdiv(HW, block_hw))
    kernel = functools.partial(_channel_attention_kernel, hw_total=HW)

    out = pl.pallas_call(
        kernel,
        out_shape=jax.ShapeDtypeStruct((N, C), x.dtype),
        grid_spec=pltpu.PrefetchScalarGridSpec(
            num_scalar_prefetch=0,
            grid=grid,
            in_specs=[
                pl.BlockSpec((block_n, C, block_hw), lambda i, k: (i, 0, k)),
                pl.BlockSpec((hidden, C), lambda i, k: (0, 0)),
                pl.BlockSpec((C, hidden), lambda i, k: (0, 0)),
            ],
            out_specs=pl.BlockSpec((block_n, C), lambda i, k: (i, 0)),
            scratch_shapes=[
                pltpu.VMEM((block_n, C), jnp.float32),   # running sum
                pltpu.VMEM((block_n, C), jnp.float32),   # running max
            ],
        ),
        compiler_params=pltpu.CompilerParams(
            dimension_semantics=("parallel", "arbitrary")),
    )(x_flat, w1, w2)

    return out.reshape(N, C, 1, 1)


def _reference(x, w1, w2):
    # Pure-JAX reference mirroring the PyTorch forward.
    avg = jnp.mean(x, axis=(2, 3))                         # (N, C)
    mx = jnp.max(x, axis=(2, 3))                           # (N, C)

    def mlp(p):
        h = jnp.maximum(p @ w1.T, 0.0)                     # (N, C//r)
        return h @ w2.T                                    # (N, C)

    return jax.nn.sigmoid(mlp(avg) + mlp(mx))[:, :, None, None]


if __name__ == "__main__":
    key = jax.random.PRNGKey(0)
    kx, k1, k2, kx2 = jax.random.split(key, 4)

    N, C, ratio = 2, 32, 8
    hidden = C // ratio
    # Deterministic synthetic weights (1x1 conv weights, bias=False).
    w1 = 0.1 * jax.random.normal(k1, (hidden, C), dtype=jnp.float32)   # fc1
    w2 = 0.1 * jax.random.normal(k2, (C, hidden), dtype=jnp.float32)   # fc2

    # Case 1: default tiling (single grid step for this small shape).
    x = jax.random.normal(kx, (N, C, 16, 16), dtype=jnp.float32)
    out = jax.block_until_ready(channel_attention(x, w1, w2))
    ref = _reference(x, w1, w2)
    assert out.shape == (N, C, 1, 1)
    assert jnp.allclose(out, ref, atol=1e-5, rtol=1e-5)

    # Case 2: force a multi-step spatial reduction (exercises accumulators).
    out2 = jax.block_until_ready(channel_attention(x, w1, w2, block_hw=128))
    assert jnp.allclose(out2, ref, atol=1e-5, rtol=1e-5)

    # Case 3: ragged spatial tile (H*W = 130, block_hw = 128 -> masked tail).
    x3 = jax.random.normal(kx2, (N, C, 13, 10), dtype=jnp.float32)
    out3 = jax.block_until_ready(channel_attention(x3, w1, w2, block_hw=128))
    ref3 = _reference(x3, w1, w2)
    assert jnp.allclose(out3, ref3, atol=1e-5, rtol=1e-5)

    print("KERNEL_OK")
</pallas_src>

<mosaic_0001>
module attributes {stable_mosaic.version = 11 : i64} {
  func.func @_channel_attention_kernel(%arg0: i32, %arg1: i32, %arg2: memref<2x32x256xf32, #tpu.memory_space<vmem>>, %arg3: memref<4x32xf32, #tpu.memory_space<vmem>>, %arg4: memref<32x4xf32, #tpu.memory_space<vmem>>, %arg5: memref<2x32xf32, #tpu.memory_space<vmem>>, %arg6: memref<2x32xf32, #tpu.memory_space<vmem>>, %arg7: memref<2x32xf32, #tpu.memory_space<vmem>>) attributes {dimension_semantics = [#tpu.dimension_semantics<parallel>, #tpu.dimension_semantics<arbitrary>], iteration_bounds = array<i64: 1, 1>, scalar_prefetch = 0 : i64, scratch_operands = 2 : i64, tpu.core_type = #tpu.core_type<tc>, window_params = [{transform_indices = @transform_0, window_bounds = array<i64: 2, 32, 256>}, {pipeline_mode = #tpu.pipeline_mode<synchronous>, transform_indices = @transform_1, window_bounds = array<i64: 4, 32>}, {pipeline_mode = #tpu.pipeline_mode<synchronous>, transform_indices = @transform_2, window_bounds = array<i64: 32, 4>}, {transform_indices = @transform_3, window_bounds = array<i64: 2, 32>}]} {
    %c0_i32 = arith.constant 0 : i32
    %0 = arith.cmpi eq, %arg1, %c0_i32 : i32
    %1 = arith.extui %0 : i1 to i32
    %c0_i32_0 = arith.constant 0 : i32
    %2 = arith.cmpi ne, %1, %c0_i32_0 : i32
    scf.if %2 {
      %cst_14 = arith.constant 0.000000e+00 : f32
      %15 = vector.broadcast %cst_14 : f32 to vector<2x32xf32>
      %c0_15 = arith.constant 0 : index
      %c0_16 = arith.constant 0 : index
      %16 = vector.load %arg6[%c0_15, %c0_16] : memref<2x32xf32, #tpu.memory_space<vmem>>, vector<2x32xf32>
      tpu.vector_store %arg6[%c0_15, %c0_16], %15 {strides = array<i32>} : memref<2x32xf32, #tpu.memory_space<vmem>>, vector<2x32xf32>,
      %cst_17 = arith.constant 0xFF800000 : f32
      %17 = vector.broadcast %cst_17 : f32 to vector<2x32xf32>
      %c0_18 = arith.constant 0 : index
      %c0_19 = arith.constant 0 : index
      %18 = vector.load %arg7[%c0_18, %c0_19] : memref<2x32xf32, #tpu.memory_space<vmem>>, vector<2x32xf32>
      tpu.vector_store %arg7[%c0_18, %c0_19], %17 {strides = array<i32>} : memref<2x32xf32, #tpu.memory_space<vmem>>, vector<2x32xf32>,
    } else {
    }
    %c0 = arith.constant 0 : index
    %c0_1 = arith.constant 0 : index
    %c0_2 = arith.constant 0 : index
    %3 = vector.load %arg2[%c0, %c0_1, %c0_2] : memref<2x32x256xf32, #tpu.memory_space<vmem>>, vector<2x32x256xf32>
    %c0_3 = arith.constant 0 : index
    %c0_4 = arith.constant 0 : index
    %4 = vector.load %arg6[%c0_3, %c0_4] : memref<2x32xf32, #tpu.memory_space<vmem>>, vector<2x32xf32>
    %cst = arith.constant dense<0.000000e+00> : vector<2x32xf32>
    %5 = vector.multi_reduction <add>, %3, %cst [2] : vector<2x32x256xf32> to vector<2x32xf32>
    %6 = arith.addf %4, %5 : vector<2x32xf32>
    %c0_5 = arith.constant 0 : index
    %c0_6 = arith.constant 0 : index
    %7 = vector.load %arg6[%c0_5, %c0_6] : memref<2x32xf32, #tpu.memory_space<vmem>>, vector<2x32xf32>
    tpu.vector_store %arg6[%c0_5, %c0_6], %6 {strides = array<i32>} : memref<2x32xf32, #tpu.memory_space<vmem>>, vector<2x32xf32>,
    %c0_7 = arith.constant 0 : index
    %c0_8 = arith.constant 0 : index
    %8 = vector.load %arg7[%c0_7, %c0_8] : memref<2x32xf32, #tpu.memory_space<vmem>>, vector<2x32xf32>
    %cst_9 = arith.constant dense<0xFF800000> : vector<2x32xf32>
    %9 = vector.multi_reduction <maximumf>, %3, %cst_9 [2] : vector<2x32x256xf32> to vector<2x32xf32>
    %10 = arith.maximumf %8, %9 : vector<2x32xf32>
    %c0_10 = arith.constant 0 : index
    %c0_11 = arith.constant 0 : index
    %11 = vector.load %arg7[%c0_10, %c0_11] : memref<2x32xf32, #tpu.memory_space<vmem>>, vector<2x32xf32>
    tpu.vector_store %arg7[%c0_10, %c0_11], %10 {strides = array<i32>} : memref<2x32xf32, #tpu.memory_space<vmem>>, vector<2x32xf32>,
    %c0_i32_12 = arith.constant 0 : i32
    %12 = arith.cmpi eq, %arg1, %c0_i32_12 : i32
    %13 = arith.extui %12 : i1 to i32
    %c0_i32_13 = arith.constant 0 : i32
    %14 = arith.cmpi ne, %13, %c0_i32_13 : i32
    scf.if %14 {
      %c0_14 = arith.constant 0 : index
      %c0_15 = arith.constant 0 : index
      %15 = vector.load %arg6[%c0_14, %c0_15] : memref<2x32xf32, #tpu.memory_space<vmem>>, vector<2x32xf32>
      %cst_16 = arith.constant 3.906250e-03 : f32
      %16 = vector.broadcast %cst_16 : f32 to vector<2x32xf32>
      %17 = arith.mulf %15, %16 : vector<2x32xf32>
      %c0_17 = arith.constant 0 : index
      %c0_18 = arith.constant 0 : index
      %18 = vector.load %arg7[%c0_17, %c0_18] : memref<2x32xf32, #tpu.memory_space<vmem>>, vector<2x32xf32>
      %19 = tpu.concatenate %17, %18 in 0 : vector<2x32xf32>, vector<2x32xf32> -> vector<4x32xf32>
      %c0_19 = arith.constant 0 : index
      %c0_20 = arith.constant 0 : index
      %20 = vector.load %arg3[%c0_19, %c0_20] : memref<4x32xf32, #tpu.memory_space<vmem>>, vector<4x32xf32>
      %c0_21 = arith.constant 0 : index
      %c0_22 = arith.constant 0 : index
      %21 = vector.load %arg4[%c0_21, %c0_22] : memref<32x4xf32, #tpu.memory_space<vmem>>, vector<32x4xf32>
      %cst_23 = arith.constant dense<0.000000e+00> : vector<4x4xf32>
      %22 = tpu.matmul %19, %20, %cst_23 {dimension_numbers = #tpu.dot_dimension_numbers<[1], [1], [0], [0], [0, 0, 1, 0], [], []>} : vector<4x32xf32>, vector<4x32xf32>, vector<4x4xf32> -> vector<4x4xf32>
      %cst_24 = arith.constant 0.000000e+00 : f32
      %23 = vector.broadcast %cst_24 : f32 to vector<4x4xf32>
      %24 = arith.maximumf %22, %23 : vector<4x4xf32>
      %cst_25 = arith.constant dense<0.000000e+00> : vector<4x32xf32>
      %25 = tpu.matmul %24, %21, %cst_25 {dimension_numbers = #tpu.dot_dimension_numbers<[1], [1], [0], [0], [0, 0, 1, 0], [], []>} : vector<4x4xf32>, vector<32x4xf32>, vector<4x32xf32> -> vector<4x32xf32>
      %26 = vector.extract_strided_slice %25 {offsets = [0, 0], sizes = [2, 32], strides = [1, 1]} : vector<4x32xf32> to vector<2x32xf32>
      %27 = vector.extract_strided_slice %25 {offsets = [2, 0], sizes = [2, 32], strides = [1, 1]} : vector<4x32xf32> to vector<2x32xf32>
      %28 = arith.addf %26, %27 : vector<2x32xf32>
      %29 = arith.negf %28 : vector<2x32xf32>
      %30 = math.exp %29 : vector<2x32xf32>
      %cst_26 = arith.constant 1.000000e+00 : f32
      %31 = vector.broadcast %cst_26 : f32 to vector<2x32xf32>
      %32 = arith.addf %31, %30 : vector<2x32xf32>
      %33 = arith.divf %31, %32 : vector<2x32xf32>
      %c0_27 = arith.constant 0 : index
      %c0_28 = arith.constant 0 : index
      %34 = vector.load %arg5[%c0_27, %c0_28] : memref<2x32xf32, #tpu.memory_space<vmem>>, vector<2x32xf32>
      tpu.vector_store %arg5[%c0_27, %c0_28], %33 {strides = array<i32>} : memref<2x32xf32, #tpu.memory_space<vmem>>, vector<2x32xf32>,
    } else {
    }
    return
  }
  func.func @transform_0(%arg0: i32, %arg1: i32) -> (i32, i32, i32) {
    %c0_i32 = arith.constant 0 : i32
    %c0_i32_0 = arith.constant 0 : i32
    return %arg0, %c0_i32, %arg1 : i32, i32, i32
  }
  func.func @transform_1(%arg0: i32, %arg1: i32) -> (i32, i32) {
    %c0_i32 = arith.constant 0 : i32
    %c0_i32_0 = arith.constant 0 : i32
    %c0_i32_1 = arith.constant 0 : i32
    return %c0_i32, %c0_i32_0 : i32, i32
  }
  func.func @transform_2(%arg0: i32, %arg1: i32) -> (i32, i32) {
    %c0_i32 = arith.constant 0 : i32
    %c0_i32_0 = arith.constant 0 : i32
    %c0_i32_1 = arith.constant 0 : i32
    return %c0_i32, %c0_i32_0 : i32, i32
  }
  func.func @transform_3(%arg0: i32, %arg1: i32) -> (i32, i32) {
    %c0_i32 = arith.constant 0 : i32
    %c0_i32_0 = arith.constant 0 : i32
    return %arg0, %c0_i32 : i32, i32
  }
}

</mosaic_0001>

<llo_original>
// kernel: tpu_custom_call.1
$region0: #{tpu_custom_call.1}
  #allocation0 [shape = 'u32[]', space=smem, size = 0x4, offset = 0x4, fixed_abs, tag = 'smem constant byte address 0x4 - core index']
  #allocation1 [shape = 'u32[144,128]{1,0:T(1,128)}', space=vmem, size = 0x12000, scoped, tag = 'internal scratch']
  #allocation2 [shape = 'f32[2,32]{1,0:T(2,128)}', space=vmem, size = 0x400, scoped, tag = 'scratch operand']
  #allocation3 [shape = 'f32[2,32]{1,0:T(2,128)}', space=vmem, size = 0x400, scoped, tag = 'scratch operand']
  %s0 = inlined_call_operand.hbm [shape: f32[2,32,256], index: 0, kind: input, shape index: {}]
  %s1 = inlined_call_operand.vmem [shape: f32[4,32], index: 1, kind: input, shape index: {}]
  %s2 = inlined_call_operand.vmem [shape: f32[32,4], index: 2, kind: input, shape index: {}]
  %s3 = inlined_call_operand.hbm [shape: f32[2,32], index: 3, kind: output, shape index: {}]
  %s4 = sld [smem:[#allocation0]]
  $region34: #{tpu_custom_call.1} parent=0
    _
  %s6 = ssub.s32 1, %s4
  %s7 = scalar_select 0, %s6, %s4
  $region1: #{tpu_custom_call.1} parent=0
    #allocation4 [shape = 'u8[65536]{0}', space=vmem, size = 0x10000, scoped, tag = 'input window, operand 0, single buffered']
    #allocation5 [shape = 's32[1]{0}', space=sflag, size = 0x4, scoped, tag = 'scoped memory for tpu_custom_call.1']
    #allocation6 [shape = 's32[1]{0}', space=sflag, size = 0x4, scoped, tag = 'scoped memory for tpu_custom_call.1']
    #allocation7 [shape = 'u8[1024]{0}', space=vmem, size = 0x400, scoped, tag = 'output window, operand 0, single buffered']
    %8 = vsyncpa [#allocation5], 0
    %9 = vsyncpa [#allocation6], 0
    // Predicated region
    $region2: #{tpu_custom_call.1} parent=1 // pred_check
      _
    $region3: #{tpu_custom_call.1} parent=1 // pred_check_branch
      %11 = sbr.rel (0) target = $region5
    $region4: #{tpu_custom_call.1} parent=1 // pred_region
      %s13 = ssub.s32 2048, 2048
      %14 = vsyncadd [#allocation5], %s13
      %s15 = sshll.u32 [#allocation4], 4
      %s16 = int_to_ptr.vmem [resolvable:$true] %s15
      %21 = dma.hbm_to_vmem [thread:$0]  %s0, 2048, %s16, [#allocation5], 256, 256, 16
    $region5: #{tpu_custom_call.1} parent=1 // pred_fallthru
      _
    // Predicated region
    $region6: #{tpu_custom_call.1} parent=1 // pred_check
      _
    $region7: #{tpu_custom_call.1} parent=1 // pred_check_branch
      %23 = sbr.rel (0) target = $region9
    $region8: #{tpu_custom_call.1} parent=1 // pred_region
      _
    $region9: #{tpu_custom_call.1} parent=1 // pred_fallthru
      _
    // Predicated region
    $region10: #{tpu_custom_call.1} parent=1 // pred_check
      _
    $region11: #{tpu_custom_call.1} parent=1 // pred_check_branch
      %25 = sbr.rel (0) target = $region13
    $region12: #{tpu_custom_call.1} parent=1 // pred_region
      _
    $region13: #{tpu_custom_call.1} parent=1 // pred_fallthru
      _
    // Predicated region
    $region14: #{tpu_custom_call.1} parent=1 // pred_check
      _
    $region15: #{tpu_custom_call.1} parent=1 // pred_check_branch
      %27 = sbr.rel (0) target = $region17
    $region16: #{tpu_custom_call.1} parent=1 // pred_region
      %28 = dma.done [#allocation5], 2048
    $region17: #{tpu_custom_call.1} parent=1 // pred_fallthru
      _
    %p29 = scmp.eq.s32.totalorder 0, 0
    // Predicated region
    $region18: #{tpu_custom_call.1} parent=1 // pred_check
      %p30 = pneg %p29
    $region19: #{tpu_custom_call.1} parent=1 // pred_check_branch
      %32 = sbr.rel (%p30) target = $region21
    $region20: #{tpu_custom_call.1} parent=1 // pred_region
      %vm33 = vcmask 254976
      %34 = vst.msk [vmem:[#allocation2] sm:$0x3] %vm33, 0.0
      %35 = vst.msk [vmem:[#allocation3] sm:$0x3] %vm33, -inf
    $region21: #{tpu_custom_call.1} parent=1 // pred_fallthru
      _
    %v36 = vld [vmem:[#allocation4] sm:$0xff]
    %v37 = vld [vmem:[#allocation4 + $0x8] sm:$0xff]
    %v38 = vld [vmem:[#allocation4 + $0x10] sm:$0xff]
    %v39 = vld [vmem:[#allocation4 + $0x18] sm:$0xff]
    %v40 = vld [vmem:[#allocation4 + $0x20] sm:$0xff]
    %v41 = vld [vmem:[#allocation4 + $0x28] sm:$0xff]
    %v42 = vld [vmem:[#allocation4 + $0x30] sm:$0xff]
    %v43 = vld [vmem:[#allocation4 + $0x38] sm:$0xff]
    %v44 = vld [vmem:[#allocation4 + $0x40] sm:$0xff]
    %v45 = vld [vmem:[#allocation4 + $0x48] sm:$0xff]
    %v46 = vld [vmem:[#allocation4 + $0x50] sm:$0xff]
    %v47 = vld [vmem:[#allocation4 + $0x58] sm:$0xff]
    %v48 = vld [vmem:[#allocation4 + $0x60] sm:$0xff]
    %v49 = vld [vmem:[#allocation4 + $0x68] sm:$0xff]
    %v50 = vld [vmem:[#allocation4 + $0x70] sm:$0xff]
    %v51 = vld [vmem:[#allocation4 + $0x78] sm:$0xff]
    %v52 = vld [vmem:[#allocation2] sm:$0x3]
    %v53 = vadd.f32 %v36, %v37
    %54 = vadd.xlane.f32.xlu0 %v53
    %v55 = vpop.xlane.xlu0 %54
    %v56 = vadd.f32 %v38, %v39
    %57 = vadd.xlane.f32.xlu0 %v56
    %v58 = vpop.xlane.xlu0 %57
    %v59 = vadd.f32 %v40, %v41
    %60 = vadd.xlane.f32.xlu0 %v59
    %v61 = vpop.xlane.xlu0 %60
    %v62 = vadd.f32 %v42, %v43
    %63 = vadd.xlane.f32.xlu0 %v62
    %v64 = vpop.xlane.xlu0 %63
    %v65 = vadd.f32 %v44, %v45
    %66 = vadd.xlane.f32.xlu0 %v65
    %v67 = vpop.xlane.xlu0 %66
    %v68 = vadd.f32 %v46, %v47
    %69 = vadd.xlane.f32.xlu0 %v68
    %v70 = vpop.xlane.xlu0 %69
    %v71 = vadd.f32 %v48, %v49
    %72 = vadd.xlane.f32.xlu0 %v71
    %v73 = vpop.xlane.xlu0 %72
    %v74 = vadd.f32 %v50, %v51
    %75 = vadd.xlane.f32.xlu0 %v74
    %v76 = vpop.xlane.xlu0 %75
    %v85 = vlaneseq
    %v86 = vand.u32 %v85, 127
    %v87 = vlaneseq
    %v88 = vshrl.u32 %v87, 7
    %v89 = vsub.s32 %v86, %v88
    %v90 = vrot.slane %v55, %v89
    %v91 = vadd.s32 %v86, 4294967288
    %v92 = vlaneseq
    %v93 = vshrl.u32 %v92, 7
    %v94 = vsub.s32 %v91, %v93
    %v95 = vrot.slane %v58, %v94
    %vm96 = vcmask 130112
    %v97 = vsel %vm96, %v95, %v90
    %v98 = vadd.s32 %v86, 4294967280
    %v99 = vlaneseq
    %v100 = vshrl.u32 %v99, 7
    %v101 = vsub.s32 %v98, %v100
    %v102 = vrot.slane %v61, %v101
    %vm103 = vcmask 195712
    %v104 = vsel %vm103, %v102, %v97
    %v105 = vadd.s32 %v86, 4294967272
    %v106 = vlaneseq
    %v107 = vshrl.u32 %v106, 7
    %v108 = vsub.s32 %v105, %v107
    %v109 = vrot.slane %v64, %v108
    %vm110 = vcmask 261312
    %v111 = vsel %vm110, %v109, %v104
    %v112 = vlaneseq
    %v113 = vshrl.u32 %v112, 7
    %v114 = vsub.s32 %v86, %v113
    %v115 = vrot.slane %v67, %v114
    %v116 = vlaneseq
    %v117 = vshrl.u32 %v116, 7
    %v118 = vsub.s32 %v91, %v117
    %v119 = vrot.slane %v70, %v118
    %v120 = vsel %vm96, %v119, %v115
    %v121 = vlaneseq
    %v122 = vshrl.u32 %v121, 7
    %v123 = vsub.s32 %v98, %v122
    %v124 = vrot.slane %v73, %v123
    %v125 = vsel %vm103, %v124, %v120
    %v126 = vlaneseq
    %v127 = vshrl.u32 %v126, 7
    %v128 = vsub.s32 %v105, %v127
    %v129 = vrot.slane %v76, %v128
    %v130 = vsel %vm110, %v129, %v125
    %vm131 = vcmask 1041409
    %v132 = vsel %vm131, %v130, %v111
    %v134 = vadd.f32 %v52, %v132
    %vm135 = vcmask 254976
    %136 = vst.msk [vmem:[#allocation2] sm:$0x3] %vm135, %v134
    %v137 = vld [vmem:[#allocation3] sm:$0x3]
    %v138 = vmax.f32 %v36, %v37
    %139 = vmax.xlane.f32.xlu0 %v138
    %v140 = vpop.xlane.xlu0 %139
    %v141 = vmax.f32 %v38, %v39
    %142 = vmax.xlane.f32.xlu0 %v141
    %v143 = vpop.xlane.xlu0 %142
    %v144 = vmax.f32 %v40, %v41
    %145 = vmax.xlane.f32.xlu0 %v144
    %v146 = vpop.xlane.xlu0 %145
    %v147 = vmax.f32 %v42, %v43
    %148 = vmax.xlane.f32.xlu0 %v147
    %v149 = vpop.xlane.xlu0 %148
    %v150 = vmax.f32 %v44, %v45
    %151 = vmax.xlane.f32.xlu0 %v150
    %v152 = vpop.xlane.xlu0 %151
    %v153 = vmax.f32 %v46, %v47
    %154 = vmax.xlane.f32.xlu0 %v153
    %v155 = vpop.xlane.xlu0 %154
    %v156 = vmax.f32 %v48, %v49
    %157 = vmax.xlane.f32.xlu0 %v156
    %v158 = vpop.xlane.xlu0 %157
    %v159 = vmax.f32 %v50, %v51
    %160 = vmax.xlane.f32.xlu0 %v159
    %v161 = vpop.xlane.xlu0 %160
    %v170 = vlaneseq
    %v171 = vshrl.u32 %v170, 7
    %v172 = vsub.s32 %v86, %v171
    %v173 = vrot.slane %v140, %v172
    %v174 = vlaneseq
    %v175 = vshrl.u32 %v174, 7
    %v176 = vsub.s32 %v91, %v175
    %v177 = vrot.slane %v143, %v176
    %v178 = vsel %vm96, %v177, %v173
    %v179 = vlaneseq
    %v180 = vshrl.u32 %v179, 7
    %v181 = vsub.s32 %v98, %v180
    %v182 = vrot.slane %v146, %v181
    %v183 = vsel %vm103, %v182, %v178
    %v184 = vlaneseq
    %v185 = vshrl.u32 %v184, 7
    %v186 = vsub.s32 %v105, %v185
    %v187 = vrot.slane %v149, %v186
    %v188 = vsel %vm110, %v187, %v183
    %v189 = vlaneseq
    %v190 = vshrl.u32 %v189, 7
    %v191 = vsub.s32 %v86, %v190
    %v192 = vrot.slane %v152, %v191
    %v193 = vlaneseq
    %v194 = vshrl.u32 %v193, 7
    %v195 = vsub.s32 %v91, %v194
    %v196 = vrot.slane %v155, %v195
    %v197 = vsel %vm96, %v196, %v192
    %v198 = vlaneseq
    %v199 = vshrl.u32 %v198, 7
    %v200 = vsub.s32 %v98, %v199
    %v201 = vrot.slane %v158, %v200
    %v202 = vsel %vm103, %v201, %v197
    %v203 = vlaneseq
    %v204 = vshrl.u32 %v203, 7
    %v205 = vsub.s32 %v105, %v204
    %v206 = vrot.slane %v161, %v205
    %v207 = vsel %vm110, %v206, %v202
    %v208 = vsel %vm131, %v207, %v188
    %v210 = vmax.f32 %v137, %v208
    %211 = vst.msk [vmem:[#allocation3] sm:$0x3] %vm135, %v210
    // Predicated region
    $region22: #{tpu_custom_call.1} parent=1 // pred_check
      %p212 = pneg %p29
    $region23: #{tpu_custom_call.1} parent=1 // pred_check_branch
      %214 = sbr.rel (%p212) target = $region25
    $region24: #{tpu_custom_call.1} parent=1 // pred_region
      %v215 = vld [vmem:[#allocation2] sm:$0x3]
      %v216 = vmul.f32 %v215, 0.00390625
      %v217 = vld [vmem:[#allocation3] sm:$0x3]
      %v219 = vrot.slane %v217, 6
      %vm221 = vcmask 1041408
      %v222 = vsel %vm221, %v216, %v219
      %v223 = vld [vmem:[%s1] sm:$0xf]
      %v224 = vld [vmem:[%s2] sm:$0xff]
      %v225 = vld [vmem:[%s2 + $0x8] sm:$0xff]
      %v226 = vld [vmem:[%s2 + $0x10] sm:$0xff]
      %v227 = vld [vmem:[%s2 + $0x18] sm:$0xff]
      %vm228 = vcmask 261120
      %v230 = vsel %vm228, %v222, 0
      %v233 = vsel %vm228, %v223, 0
      %235 = vmatprep.subr.mxu0 0.0
      %236 = vmatpush1.xpose.msra.mxu0 0.0
      %237 = vmatprep.subr.mxu0 0.0
      %238 = vmatpush1.xpose.msra.mxu0 0.0
      %239 = vmatprep.subr.mxu0 0.0
      %240 = vmatpush1.xpose.msra.mxu0 0.0
      %241 = vmatprep.subr.mxu0 0.0
      %242 = vmatpush1.xpose.msra.mxu0 0.0
      %243 = vmatprep.subr.mxu0 0.0
      %244 = vmatpush1.xpose.msra.mxu0 0.0
      %245 = vmatprep.subr.mxu0 0.0
      %246 = vmatpush1.xpose.msra.mxu0 0.0
      %247 = vmatprep.subr.mxu0 0.0
      %248 = vmatpush1.xpose.msra.mxu0 0.0
      %249 = vmatprep.subr.mxu0 0.0
      %250 = vmatpush1.xpose.msra.mxu0 0.0
      %251 = vmatprep.subr.mxu0 0.0
      %252 = vmatpush1.xpose.msra.mxu0 0.0
      %253 = vmatprep.subr.mxu0 0.0
      %254 = vmatpush1.xpose.msra.mxu0 0.0
      %255 = vmatprep.subr.mxu0 0.0
      %256 = vmatpush1.xpose.msra.mxu0 0.0
      %257 = vmatprep.subr.mxu0 0.0
      %258 = vmatpush1.xpose.msra.mxu0 0.0
      %259 = vmatprep.subr.mxu0 0.0
      %260 = vmatpush1.xpose.msra.mxu0 0.0
      %261 = vmatprep.subr.mxu0 0.0
      %262 = vmatpush1.xpose.msra.mxu0 0.0
      %263 = vmatprep.subr.mxu0 0.0
      %264 = vmatpush1.xpose.msra.mxu0 0.0
      %265 = vmatprep.subr.mxu0 0.0
      %266 = vmatpush1.xpose.msra.mxu0 %v233
      %267 = vmatprep.subr.mxu0 0.0
      %268 = vmatpush2.xpose.msra.mxu0 0.0
      %269 = vmatprep.subr.mxu0 0.0
      %270 = vmatpush2.xpose.msra.mxu0 0.0
      %271 = vmatprep.subr.mxu0 0.0
      %272 = vmatpush2.xpose.msra.mxu0 0.0
      %273 = vmatprep.subr.mxu0 0.0
      %274 = vmatpush2.xpose.msra.mxu0 0.0
      %275 = vmatprep.subr.mxu0 0.0
      %276 = vmatpush2.xpose.msra.mxu0 0.0
      %277 = vmatprep.subr.mxu0 0.0
      %278 = vmatpush2.xpose.msra.mxu0 0.0
      %279 = vmatprep.subr.mxu0 0.0
      %280 = vmatpush2.xpose.msra.mxu0 0.0
      %281 = vmatprep.subr.mxu0 0.0
      %282 = vmatpush2.xpose.msra.mxu0 0.0
      %283 = vmatprep.subr.mxu0 0.0
      %284 = vmatpush2.xpose.msra.mxu0 0.0
      %285 = vmatprep.subr.mxu0 0.0
      %286 = vmatpush2.xpose.msra.mxu0 0.0
      %287 = vmatprep.subr.mxu0 0.0
      %288 = vmatpush2.xpose.msra.mxu0 0.0
      %289 = vmatprep.subr.mxu0 0.0
      %290 = vmatpush2.xpose.msra.mxu0 0.0
      %291 = vmatprep.subr.mxu0 0.0
      %292 = vmatpush2.xpose.msra.mxu0 0.0
      %293 = vmatprep.subr.mxu0 0.0
      %294 = vmatpush2.xpose.msra.mxu0 0.0
      %295 = vmatprep.subr.mxu0 0.0
      %296 = vmatpush2.xpose.msra.mxu0 0.0
      %297 = vmatprep.subr.mxu0 0.0
      %298 = vmatpush2.xpose.msra.mxu0 0.0
      %299 = vmatprep.mubr.f32.mxu0 0.0
      %300 = vmatmul.mubr.f32.gmra.mxu0 %v230
      %v301 = vpop.f32.mrf.mxu0
      %v302 = vadd.f32 0.0, %v301
      %v303 = vpop.f32.mrf.mxu0
      %304 = vdwg.mxu0
      %v305 = vmax.f32 %v302, 0.0
      %vm306 = vcmask 31744
      %v308 = vsel %vm306, %v305, 0
      %v311 = vsel %vm306, %v224, 0
      %v314 = vsel %vm306, %v225, 0
      %v317 = vsel %vm306, %v226, 0
      %v320 = vsel %vm306, %v227, 0
      %322 = vmatprep.subr.mxu0 0.0
      %323 = vmatpush1.xpose.msra.mxu0 0.0
      %324 = vmatprep.subr.mxu0 0.0
      %325 = vmatpush1.xpose.msra.mxu0 0.0
      %326 = vmatprep.subr.mxu0 0.0
      %327 = vmatpush1.xpose.msra.mxu0 0.0
      %328 = vmatprep.subr.mxu0 0.0
      %329 = vmatpush1.xpose.msra.mxu0 0.0
      %330 = vmatprep.subr.mxu0 0.0
      %331 = vmatpush1.xpose.msra.mxu0 0.0
      %332 = vmatprep.subr.mxu0 0.0
      %333 = vmatpush1.xpose.msra.mxu0 0.0
      %334 = vmatprep.subr.mxu0 0.0
      %335 = vmatpush1.xpose.msra.mxu0 0.0
      %336 = vmatprep.subr.mxu0 0.0
      %337 = vmatpush1.xpose.msra.mxu0 0.0
      %338 = vmatprep.subr.mxu0 0.0
      %339 = vmatpush1.xpose.msra.mxu0 0.0
      %340 = vmatprep.subr.mxu0 0.0
      %341 = vmatpush1.xpose.msra.mxu0 0.0
      %342 = vmatprep.subr.mxu0 0.0
      %343 = vmatpush1.xpose.msra.mxu0 0.0
      %344 = vmatprep.subr.mxu0 0.0
      %345 = vmatpush1.xpose.msra.mxu0 0.0
      %346 = vmatprep.subr.mxu0 0.0
      %347 = vmatpush1.xpose.msra.mxu0 %v320
      %348 = vmatprep.subr.mxu0 0.0
      %349 = vmatpush1.xpose.msra.mxu0 %v317
      %350 = vmatprep.subr.mxu0 0.0
      %351 = vmatpush1.xpose.msra.mxu0 %v314
      %352 = vmatprep.subr.mxu0 0.0
      %353 = vmatpush1.xpose.msra.mxu0 %v311
      %354 = vmatprep.subr.mxu0 0.0
      %355 = vmatpush2.xpose.msra.mxu0 0.0
      %356 = vmatprep.subr.mxu0 0.0
      %357 = vmatpush2.xpose.msra.mxu0 0.0
      %358 = vmatprep.subr.mxu0 0.0
      %359 = vmatpush2.xpose.msra.mxu0 0.0
      %360 = vmatprep.subr.mxu0 0.0
      %361 = vmatpush2.xpose.msra.mxu0 0.0
      %362 = vmatprep.subr.mxu0 0.0
      %363 = vmatpush2.xpose.msra.mxu0 0.0
      %364 = vmatprep.subr.mxu0 0.0
      %365 = vmatpush2.xpose.msra.mxu0 0.0
      %366 = vmatprep.subr.mxu0 0.0
      %367 = vmatpush2.xpose.msra.mxu0 0.0
      %368 = vmatprep.subr.mxu0 0.0
      %369 = vmatpush2.xpose.msra.mxu0 0.0
      %370 = vmatprep.subr.mxu0 0.0
      %371 = vmatpush2.xpose.msra.mxu0 0.0
      %372 = vmatprep.subr.mxu0 0.0
      %373 = vmatpush2.xpose.msra.mxu0 0.0
      %374 = vmatprep.subr.mxu0 0.0
      %375 = vmatpush2.xpose.msra.mxu0 0.0
      %376 = vmatprep.subr.mxu0 0.0
      %377 = vmatpush2.xpose.msra.mxu0 0.0
      %378 = vmatprep.subr.mxu0 0.0
      %379 = vmatpush2.xpose.msra.mxu0 0.0
      %380 = vmatprep.subr.mxu0 0.0
      %381 = vmatpush2.xpose.msra.mxu0 0.0
      %382 = vmatprep.subr.mxu0 0.0
      %383 = vmatpush2.xpose.msra.mxu0 0.0
      %384 = vmatprep.subr.mxu0 0.0
      %385 = vmatpush2.xpose.msra.mxu0 0.0
      %386 = vmatprep.mubr.f32.mxu0 0.0
      %387 = vmatmul.mubr.f32.gmra.mxu0 %v308
      %v388 = vpop.f32.mrf.mxu0
      %v389 = vadd.f32 0.0, %v388
      %v390 = vpop.f32.mrf.mxu0
      %391 = vdwg.mxu0
      %v393 = vrot.slane %v389, 2
      %v395 = vadd.f32 %v389, %v393
      %v396 = vxor.u32 %v395, 2147483648
      %v397 = vmul.f32 %v396, 1.442695
      %v398 = vpow.pop %v397
      %v399 = vadd.f32 %v398, 1.0
      %v400 = vrcp.pop %v399
      %v401 = vmul.f32 1.0, %v400
      %402 = vst.msk [vmem:[#allocation7] sm:$0x3] %vm135, %v401
    $region25: #{tpu_custom_call.1} parent=1 // pred_fallthru
      _
    // Predicated region
    $region26: #{tpu_custom_call.1} parent=1 // pred_check
      _
    $region27: #{tpu_custom_call.1} parent=1 // pred_check_branch
      %404 = sbr.rel (0) target = $region29
    $region28: #{tpu_custom_call.1} parent=1 // pred_region
      %s406 = ssub.s32 32, 32
      %407 = vsyncadd [#allocation6], %s406
      %s409 = sshll.u32 [#allocation7], 4
      %s410 = int_to_ptr.vmem [resolvable:$true] %s409
      %412 = dma.vmem_to_hbm [thread:$0]  %s410, 32, %s3, [#allocation6]
    $region29: #{tpu_custom_call.1} parent=1 // pred_fallthru
      _
    // Predicated region
    $region30: #{tpu_custom_call.1} parent=1 // pred_check
      _
    $region31: #{tpu_custom_call.1} parent=1 // pred_check_branch
      %414 = sbr.rel (0) target = $region33
    $region32: #{tpu_custom_call.1} parent=1 // pred_region
      %415 = dma.done [#allocation6], 32
    $region33: #{tpu_custom_call.1} parent=1 // pred_fallthru
      _
    %416 = vsyncpa [#allocation5], 1
    %417 = vsyncpa [#allocation6], 1

</llo_original>
